<compile_context>
chip_gen: v5e
topology: v5e:2x2
jax: 0.10.0
libtpu: 0.0.40
codegen_flags: <defaults>
</compile_context>

<pallas_src>
import jax
import jax.numpy as jnp
from jax import lax
from jax.experimental import pallas as pl
from jax.experimental.pallas import tpu as pltpu


def _masked_linear_kernel_f32out(x_ref, w_ref, b_ref, o_ref):
    """f32 output: accumulate directly into the k-resident output block.

    x_ref: (tm, tk) activations, w_ref: (tn, tk) pre-masked weight
    (PyTorch [out, in] layout -> contract last dims), b_ref: (1, tn) bias,
    o_ref: (tm, tn) f32 output tile (same block index for all k -> resident).
    """
    k = pl.program_id(2)

    @pl.when(k == 0)
    def _():
        o_ref[...] = jnp.broadcast_to(b_ref[...], o_ref.shape)

    o_ref[...] += lax.dot_general(
        x_ref[...], w_ref[...],
        dimension_numbers=(((1,), (1,)), ((), ())),
        preferred_element_type=jnp.float32)


def _masked_linear_kernel_acc(x_ref, w_ref, b_ref, o_ref, acc_ref):
    """Generic output dtype: f32 scratch accumulator, single finalize store."""
    k = pl.program_id(2)

    @pl.when(k == 0)
    def _():
        acc_ref[...] = jnp.broadcast_to(b_ref[...], acc_ref.shape)

    acc_ref[...] += lax.dot_general(
        x_ref[...], w_ref[...],
        dimension_numbers=(((1,), (1,)), ((), ())),
        preferred_element_type=jnp.float32)

    @pl.when(k == pl.num_programs(2) - 1)
    def _():
        o_ref[...] = acc_ref[...].astype(o_ref.dtype)


def _round_up(x, m):
    return ((x + m - 1) // m) * m


def _pad2d(a, rows, cols):
    pr, pc = rows - a.shape[0], cols - a.shape[1]
    if pr == 0 and pc == 0:
        return a
    return jnp.pad(a, ((0, pr), (0, pc)))


class MaskedLinearPallas:
    """Pallas TPU implementation of MaskedLinear with cached fused parameters.

    The static mask is folded into the weight once, the optional context
    projection weight is fused along the contraction axis ([W || Wc]), and
    both are padded to tile multiples at construction.  The per-call hot
    path only pads the (small) activations and launches one tiled matmul.
    """

    def __init__(self, weight, mask, bias=None, cond_weight=None, *,
                 tm_max=512, tn_max=512, tk_max=2048, compute_dtype=None):
        weight = jnp.asarray(weight)
        mask = jnp.asarray(mask)
        self.out_features, self.in_features = weight.shape
        self.tm_max = int(tm_max)
        self.compute_dtype = compute_dtype

        out_f = self.out_features
        if bias is None:
            bias = jnp.zeros((out_f,), dtype=jnp.float32)
        bias = jnp.asarray(bias)

        # Fold the static MADE mask into the weight ONCE (f32 fold, optional
        # cast afterwards so the binary mask costs nothing in reduced precision).
        w_masked = mask.astype(weight.dtype) * weight
        if compute_dtype is not None:
            w_masked = w_masked.astype(compute_dtype)

        # --- N tiling (shared by context / no-context variants) ---
        tn = min(_round_up(out_f, 128), int(tn_max))
        # v7x shards "parallel" grid axes over 2 TensorCores; for the common
        # small-batch case grid_M == 1, so split N into >= 2 blocks whenever
        # out_features allows it so both cores get work.
        if _round_up(out_f, tn) // tn == 1 and out_f > 128:
            tn = _round_up(-(-out_f // 2), 128)
        Np = _round_up(out_f, tn)
        self._tn, self._Np = tn, Np

        self._b_pad = _pad2d(bias.reshape(1, out_f).astype(jnp.float32), 1, Np)

        def _prep_weight(w_full):
            K = w_full.shape[1]
            tk = min(_round_up(K, 128), int(tk_max))
            Kp = _round_up(K, tk)
            return _pad2d(w_full, Np, Kp), tk, Kp

        # Cached padded weights: plain and (optionally) fused with cond_weight.
        self._plain = _prep_weight(w_masked)
        self._fused = None
        if cond_weight is not None:
            cond_weight = jnp.asarray(cond_weight).astype(w_masked.dtype)
            self._fused = _prep_weight(
                jnp.concatenate([w_masked, cond_weight], axis=1))

    def __call__(self, x, context=None):
        out_f = self.out_features
        out_dtype = x.dtype

        if context is not None:
            assert self._fused is not None, (
                "context was given but no cond_weight was provided")
            w_pad, tk, Kp = self._fused
            x_k = jnp.concatenate([x, context.astype(x.dtype)], axis=1)
        else:
            w_pad, tk, Kp = self._plain
            x_k = x
        if self.compute_dtype is not None:
            x_k = x_k.astype(self.compute_dtype)

        B = x.shape[0]
        tm = min(_round_up(B, 8), self.tm_max)
        Mp = _round_up(B, tm)
        tn, Np = self._tn, self._Np

        # Per-call padding touches only the (small) activations; zero padding
        # of the K tail / M rows is load-bearing for the exactness of the
        # reduction and bias, and padded rows/cols are sliced off below.
        x_p = _pad2d(x_k, Mp, Kp)

        grid = (Mp // tm, Np // tn, Kp // tk)

        use_acc = jnp.dtype(out_dtype) != jnp.dtype(jnp.float32)
        kernel = _masked_linear_kernel_acc if use_acc else _masked_linear_kernel_f32out
        scratch = [pltpu.VMEM((tm, tn), jnp.float32)] if use_acc else []

        # Double-buffered in/out tiles (+ optional scratch) with headroom,
        # capped at 48 MiB so the same config is safe on v7x's 64 MiB VMEM.
        vmem_bytes = (2 * tm * tk * x_p.dtype.itemsize
                      + 2 * tn * tk * w_pad.dtype.itemsize
                      + 2 * tn * 4
                      + 2 * tm * tn * jnp.dtype(out_dtype).itemsize
                      + (tm * tn * 4 if use_acc else 0))
        vmem_limit = min(max(int(vmem_bytes * 1.5) + (2 << 20), 32 << 20),
                         48 << 20)

        out_p = pl.pallas_call(
            kernel,
            out_shape=jax.ShapeDtypeStruct((Mp, Np), out_dtype),
            grid=grid,
            in_specs=[
                pl.BlockSpec((tm, tk), lambda i, j, k: (i, k)),   # activations
                pl.BlockSpec((tn, tk), lambda i, j, k: (j, k)),   # masked [W||Wc]
                pl.BlockSpec((1, tn), lambda i, j, k: (0, j)),    # bias
            ],
            out_specs=pl.BlockSpec((tm, tn), lambda i, j, k: (i, j)),
            scratch_shapes=scratch,
            compiler_params=pltpu.CompilerParams(
                dimension_semantics=("parallel", "parallel", "arbitrary"),
                vmem_limit_bytes=vmem_limit,
            ),
        )(x_p, w_pad, self._b_pad)

        return out_p[:B, :out_f]


def masked_linear(x, weight, mask, bias, context=None, cond_weight=None, **kw):
    """Functional convenience wrapper (no parameter caching across calls)."""
    return MaskedLinearPallas(weight, mask, bias, cond_weight, **kw)(x, context)


if __name__ == "__main__":
    key = jax.random.PRNGKey(0)

    # ---- small MADE-style case (matches the PyTorch module defaults) ----
    B, in_f, out_f, ctx_f = 8, 32, 32, 16
    k_x, k_w, k_b, k_c, k_wc = jax.random.split(key, 5)

    x = jax.random.normal(k_x, (B, in_f), dtype=jnp.float32)
    bound = 1.0 / (in_f ** 0.5)
    weight = jax.random.uniform(k_w, (out_f, in_f), minval=-bound, maxval=bound,
                                dtype=jnp.float32)
    bias = jax.random.uniform(k_b, (out_f,), minval=-bound, maxval=bound,
                              dtype=jnp.float32)
    # Deterministic MADE-style lower-triangular binary mask.
    mask = (jnp.arange(in_f)[None, :] <= jnp.arange(out_f)[:, None]).astype(jnp.float32)
    context = jax.random.normal(k_c, (B, ctx_f), dtype=jnp.float32)
    cbound = 1.0 / (ctx_f ** 0.5)
    cond_weight = jax.random.uniform(k_wc, (out_f, ctx_f), minval=-cbound,
                                     maxval=cbound, dtype=jnp.float32)

    layer = MaskedLinearPallas(weight, mask, bias, cond_weight)
    out = jax.block_until_ready(layer(x, context))     # with context
    out_nc = jax.block_until_ready(layer(x))           # context is None branch

    ref = x @ (mask * weight).T + bias[None, :] + context @ cond_weight.T
    ref_nc = x @ (mask * weight).T + bias[None, :]
    assert out.shape == (B, out_f) and out_nc.shape == (B, out_f)
    assert jnp.allclose(out, ref, atol=1e-5, rtol=1e-5)
    assert jnp.allclose(out_nc, ref_nc, atol=1e-5, rtol=1e-5)

    # ---- ragged case exercising M/N/K padding and a multi-block (2,2,2) grid ----
    B2, in2, out2, ctx2 = 10, 200, 200, 12
    ks = jax.random.split(key, 6)
    x2 = jax.random.normal(ks[0], (B2, in2), dtype=jnp.float32)
    w2 = jax.random.normal(ks[1], (out2, in2), dtype=jnp.float32) * 0.05
    b2 = jax.random.normal(ks[2], (out2,), dtype=jnp.float32) * 0.05
    m2 = (jax.random.uniform(ks[3], (out2, in2)) > 0.5).astype(jnp.float32)
    c2 = jax.random.normal(ks[4], (B2, ctx2), dtype=jnp.float32)
    wc2 = jax.random.normal(ks[5], (out2, ctx2), dtype=jnp.float32) * 0.05

    layer2 = MaskedLinearPallas(w2, m2, b2, wc2, tm_max=8, tk_max=128)
    out2_ = jax.block_until_ready(layer2(x2, c2))
    ref2 = x2 @ (m2 * w2).T + b2[None, :] + c2 @ wc2.T
    assert out2_.shape == (B2, out2)
    assert jnp.allclose(out2_, ref2, atol=1e-4, rtol=1e-4)

    print("KERNEL_OK")
</pallas_src>

<mosaic_0001>
module attributes {stable_mosaic.version = 11 : i64} {
  func.func @_masked_linear_kernel_f32out(%arg0: i32, %arg1: i32, %arg2: i32, %arg3: memref<8x128xf32, #tpu.memory_space<vmem>>, %arg4: memref<128x128xf32, #tpu.memory_space<vmem>>, %arg5: memref<1x128xf32, #tpu.memory_space<vmem>>, %arg6: memref<8x128xf32, #tpu.memory_space<vmem>>) attributes {dimension_semantics = [#tpu.dimension_semantics<parallel>, #tpu.dimension_semantics<parallel>, #tpu.dimension_semantics<arbitrary>], iteration_bounds = array<i64: 1, 1, 1>, scalar_prefetch = 0 : i64, scratch_operands = 0 : i64, tpu.core_type = #tpu.core_type<tc>, window_params = [{transform_indices = @transform_0, window_bounds = array<i64: 8, 128>}, {transform_indices = @transform_1, window_bounds = array<i64: 128, 128>}, {transform_indices = @transform_2, window_bounds = array<i64: 1, 128>}, {transform_indices = @transform_3, window_bounds = array<i64: 8, 128>}]} {
    %c0_i32 = arith.constant 0 : i32
    %0 = arith.cmpi eq, %arg2, %c0_i32 : i32
    %1 = arith.extui %0 : i1 to i32
    %c0_i32_0 = arith.constant 0 : i32
    %2 = arith.cmpi ne, %1, %c0_i32_0 : i32
    scf.if %2 {
      %c0_8 = arith.constant 0 : index
      %c0_9 = arith.constant 0 : index
      %9 = vector.load %arg5[%c0_8, %c0_9] : memref<1x128xf32, #tpu.memory_space<vmem>>, vector<1x128xf32>
      %10 = vector.shape_cast %9 : vector<1x128xf32> to vector<1x128xf32>
      %11 = vector.broadcast %10 : vector<1x128xf32> to vector<8x128xf32>
      %c0_10 = arith.constant 0 : index
      %c0_11 = arith.constant 0 : index
      %12 = vector.load %arg6[%c0_10, %c0_11] : memref<8x128xf32, #tpu.memory_space<vmem>>, vector<8x128xf32>
      tpu.vector_store %arg6[%c0_10, %c0_11], %11 {strides = array<i32>} : memref<8x128xf32, #tpu.memory_space<vmem>>, vector<8x128xf32>,
    } else {
    }
    %c0 = arith.constant 0 : index
    %c0_1 = arith.constant 0 : index
    %3 = vector.load %arg6[%c0, %c0_1] : memref<8x128xf32, #tpu.memory_space<vmem>>, vector<8x128xf32>
    %c0_2 = arith.constant 0 : index
    %c0_3 = arith.constant 0 : index
    %4 = vector.load %arg3[%c0_2, %c0_3] : memref<8x128xf32, #tpu.memory_space<vmem>>, vector<8x128xf32>
    %c0_4 = arith.constant 0 : index
    %c0_5 = arith.constant 0 : index
    %5 = vector.load %arg4[%c0_4, %c0_5] : memref<128x128xf32, #tpu.memory_space<vmem>>, vector<128x128xf32>
    %cst = arith.constant dense<0.000000e+00> : vector<8x128xf32>
    %6 = tpu.matmul %4, %5, %cst {dimension_numbers = #tpu.dot_dimension_numbers<[1], [1], [0], [0], [0, 0, 1, 0], [], []>} : vector<8x128xf32>, vector<128x128xf32>, vector<8x128xf32> -> vector<8x128xf32>
    %7 = arith.addf %3, %6 : vector<8x128xf32>
    %c0_6 = arith.constant 0 : index
    %c0_7 = arith.constant 0 : index
    %8 = vector.load %arg6[%c0_6, %c0_7] : memref<8x128xf32, #tpu.memory_space<vmem>>, vector<8x128xf32>
    tpu.vector_store %arg6[%c0_6, %c0_7], %7 {strides = array<i32>} : memref<8x128xf32, #tpu.memory_space<vmem>>, vector<8x128xf32>,
    return
  }
  func.func @transform_0(%arg0: i32, %arg1: i32, %arg2: i32) -> (i32, i32) {
    %c0_i32 = arith.constant 0 : i32
    return %arg0, %arg2 : i32, i32
  }
  func.func @transform_1(%arg0: i32, %arg1: i32, %arg2: i32) -> (i32, i32) {
    %c0_i32 = arith.constant 0 : i32
    return %arg1, %arg2 : i32, i32
  }
  func.func @transform_2(%arg0: i32, %arg1: i32, %arg2: i32) -> (i32, i32) {
    %c0_i32 = arith.constant 0 : i32
    %c0_i32_0 = arith.constant 0 : i32
    return %c0_i32, %arg1 : i32, i32
  }
  func.func @transform_3(%arg0: i32, %arg1: i32, %arg2: i32) -> (i32, i32) {
    %c0_i32 = arith.constant 0 : i32
    return %arg0, %arg1 : i32, i32
  }
}

</mosaic_0001>

<llo_original>
// kernel: tpu_custom_call.1
$region0: #{tpu_custom_call.1}
  #allocation0 [shape = 'u32[]', space=smem, size = 0x4, offset = 0x4, fixed_abs, tag = 'smem constant byte address 0x4 - core index']
  #allocation1 [shape = 'u32[72,128]{1,0:T(1,128)}', space=vmem, size = 0x9000, scoped, tag = 'internal scratch']
  %s0 = inlined_call_operand.hbm [shape: f32[8,128], index: 0, kind: input, shape index: {}]
  %s1 = inlined_call_operand.hbm [shape: f32[128,128], index: 1, kind: input, shape index: {}]
  %s2 = inlined_call_operand.vmem [shape: f32[1,128], index: 2, kind: input, shape index: {}]
  %s3 = inlined_call_operand.hbm [shape: f32[8,128], index: 3, kind: output, shape index: {}]
  %s4 = sld [smem:[#allocation0]]
  $region34: #{tpu_custom_call.1} parent=0
    _
  %s6 = ssub.s32 1, %s4
  %s7 = scalar_select 0, %s6, %s4
  $region1: #{tpu_custom_call.1} parent=0
    #allocation2 [shape = 'u8[4096]{0}', space=vmem, size = 0x1000, scoped, tag = 'input window, operand 0, single buffered']
    #allocation3 [shape = 's32[1]{0}', space=sflag, size = 0x4, scoped, tag = 'scoped memory for tpu_custom_call.1']
    #allocation4 [shape = 's32[1]{0}', space=sflag, size = 0x4, scoped, tag = 'scoped memory for tpu_custom_call.1']
    #allocation5 [shape = 'u8[65536]{0}', space=vmem, size = 0x10000, scoped, tag = 'input window, operand 1, single buffered']
    #allocation6 [shape = 's32[1]{0}', space=sflag, size = 0x4, scoped, tag = 'scoped memory for tpu_custom_call.1']
    #allocation7 [shape = 'u8[4096]{0}', space=vmem, size = 0x1000, scoped, tag = 'output window, operand 0, single buffered']
    %8 = vsyncpa [#allocation3], 0
    %9 = vsyncpa [#allocation6], 0
    %10 = vsyncpa [#allocation4], 0
    // Predicated region
    $region2: #{tpu_custom_call.1} parent=1 // pred_check
      _
    $region3: #{tpu_custom_call.1} parent=1 // pred_check_branch
      %12 = sbr.rel (0) target = $region5
    $region4: #{tpu_custom_call.1} parent=1 // pred_region
      %14 = vsyncadd [#allocation3], 0
      %s16 = sshll.u32 %s0, 4
      %s17 = int_to_ptr.hbm [resolvable:$true] %s16
      %s18 = sshll.u32 [#allocation2], 4
      %s19 = int_to_ptr.vmem [resolvable:$true] %s18
      %21 = dma.hbm_to_vmem [thread:$0]  %s17, 128, %s19, [#allocation3]
    $region5: #{tpu_custom_call.1} parent=1 // pred_fallthru
      _
    // Predicated region
    $region6: #{tpu_custom_call.1} parent=1 // pred_check
      _
    $region7: #{tpu_custom_call.1} parent=1 // pred_check_branch
      %23 = sbr.rel (0) target = $region9
    $region8: #{tpu_custom_call.1} parent=1 // pred_region
      %25 = vsyncadd [#allocation6], 0
      %s26 = sshll.u32 %s1, 4
      %s27 = int_to_ptr.hbm [resolvable:$true] %s26
      %s28 = sshll.u32 [#allocation5], 4
      %s29 = int_to_ptr.vmem [resolvable:$true] %s28
      %34 = dma.hbm_to_vmem [thread:$0]  %s27, 2048, %s29, [#allocation6], 128, 128, 8
    $region9: #{tpu_custom_call.1} parent=1 // pred_fallthru
      _
    // Predicated region
    $region10: #{tpu_custom_call.1} parent=1 // pred_check
      _
    $region11: #{tpu_custom_call.1} parent=1 // pred_check_branch
      %36 = sbr.rel (0) target = $region13
    $region12: #{tpu_custom_call.1} parent=1 // pred_region
      _
    $region13: #{tpu_custom_call.1} parent=1 // pred_fallthru
      _
    // Predicated region
    $region14: #{tpu_custom_call.1} parent=1 // pred_check
      _
    $region15: #{tpu_custom_call.1} parent=1 // pred_check_branch
      %38 = sbr.rel (0) target = $region17
    $region16: #{tpu_custom_call.1} parent=1 // pred_region
      %40 = dma.done [#allocation3], 128
    $region17: #{tpu_custom_call.1} parent=1 // pred_fallthru
      _
    // Predicated region
    $region18: #{tpu_custom_call.1} parent=1 // pred_check
      _
    $region19: #{tpu_custom_call.1} parent=1 // pred_check_branch
      %42 = sbr.rel (0) target = $region21
    $region20: #{tpu_custom_call.1} parent=1 // pred_region
      %44 = dma.done [#allocation6], 2048
    $region21: #{tpu_custom_call.1} parent=1 // pred_fallthru
      _
    %p45 = scmp.eq.s32.totalorder 0, 0
    // Predicated region
    $region22: #{tpu_custom_call.1} parent=1 // pred_check
      %p46 = pneg %p45
    $region23: #{tpu_custom_call.1} parent=1 // pred_check_branch
      %48 = sbr.rel (%p46) target = $region25
    $region24: #{tpu_custom_call.1} parent=1 // pred_region
      %v49 = vld [vmem:[%s2] sm:$0x1]
      %v51 = vperm.slane %v49, 0
      %53 = vst [vmem:[#allocation7] sm:$0xff] %v51
    $region25: #{tpu_custom_call.1} parent=1 // pred_fallthru
      _
    %v54 = vld [vmem:[#allocation7] sm:$0xff]
    %v55 = vld [vmem:[#allocation2] sm:$0xff]
    %v56 = vld [vmem:[#allocation5] sm:$0xff]
    %v57 = vld [vmem:[#allocation5 + $0x8] sm:$0xff]
    %v58 = vld [vmem:[#allocation5 + $0x10] sm:$0xff]
    %v59 = vld [vmem:[#allocation5 + $0x18] sm:$0xff]
    %v60 = vld [vmem:[#allocation5 + $0x20] sm:$0xff]
    %v61 = vld [vmem:[#allocation5 + $0x28] sm:$0xff]
    %v62 = vld [vmem:[#allocation5 + $0x30] sm:$0xff]
    %v63 = vld [vmem:[#allocation5 + $0x38] sm:$0xff]
    %v64 = vld [vmem:[#allocation5 + $0x40] sm:$0xff]
    %v65 = vld [vmem:[#allocation5 + $0x48] sm:$0xff]
    %v66 = vld [vmem:[#allocation5 + $0x50] sm:$0xff]
    %v67 = vld [vmem:[#allocation5 + $0x58] sm:$0xff]
    %v68 = vld [vmem:[#allocation5 + $0x60] sm:$0xff]
    %v69 = vld [vmem:[#allocation5 + $0x68] sm:$0xff]
    %v70 = vld [vmem:[#allocation5 + $0x70] sm:$0xff]
    %v71 = vld [vmem:[#allocation5 + $0x78] sm:$0xff]
    %72 = vmatpush.xpose.msra.mxu0 %v71
    %73 = vmatpush.xpose.msra.mxu0 %v70
    %74 = vmatpush.xpose.msra.mxu0 %v69
    %75 = vmatpush.xpose.msra.mxu0 %v68
    %76 = vmatpush.xpose.msra.mxu0 %v67
    %77 = vmatpush.xpose.msra.mxu0 %v66
    %78 = vmatpush.xpose.msra.mxu0 %v65
    %79 = vmatpush.xpose.msra.mxu0 %v64
    %80 = vmatpush.xpose.msra.mxu0 %v63
    %81 = vmatpush.xpose.msra.mxu0 %v62
    %82 = vmatpush.xpose.msra.mxu0 %v61
    %83 = vmatpush.xpose.msra.mxu0 %v60
    %84 = vmatpush.xpose.msra.mxu0 %v59
    %85 = vmatpush.xpose.msra.mxu0 %v58
    %86 = vmatpush.xpose.msra.mxu0 %v57
    %87 = vmatpush.xpose.msra.mxu0 %v56
    %88 = vmatmul.f32.gmra.mxu0 %v55
    %v89 = vpop.f32.mrf.mxu0
    %v90 = vadd.f32 0.0, %v89
    %91 = vdwg.mxu0
    %v92 = vadd.f32 %v54, %v90
    %93 = vst [vmem:[#allocation7] sm:$0xff] %v92
    // Predicated region
    $region26: #{tpu_custom_call.1} parent=1 // pred_check
      _
    $region27: #{tpu_custom_call.1} parent=1 // pred_check_branch
      %95 = sbr.rel (0) target = $region29
    $region28: #{tpu_custom_call.1} parent=1 // pred_region
      %97 = vsyncadd [#allocation4], 0
      %s99 = sshll.u32 [#allocation7], 4
      %s100 = int_to_ptr.vmem [resolvable:$true] %s99
      %s101 = sshll.u32 %s3, 4
      %s102 = int_to_ptr.hbm [resolvable:$true] %s101
      %104 = dma.vmem_to_hbm [thread:$0]  %s100, 128, %s102, [#allocation4]
    $region29: #{tpu_custom_call.1} parent=1 // pred_fallthru
      _
    // Predicated region
    $region30: #{tpu_custom_call.1} parent=1 // pred_check
      _
    $region31: #{tpu_custom_call.1} parent=1 // pred_check_branch
      %106 = sbr.rel (0) target = $region33
    $region32: #{tpu_custom_call.1} parent=1 // pred_region
      %108 = dma.done [#allocation4], 128
    $region33: #{tpu_custom_call.1} parent=1 // pred_fallthru
      _
    %109 = vsyncpa [#allocation3], 1
    %110 = vsyncpa [#allocation6], 1
    %111 = vsyncpa [#allocation4], 1

</llo_original>
